<compile_context>
chip_gen: v7x
topology: tpu7x:2x2x1
jax: 0.10.0
libtpu: 0.0.40
codegen_flags: <defaults>
</compile_context>

<pallas_src>
import jax
import jax.numpy as jnp
from jax.experimental import pallas as pl
from jax.experimental.pallas import tpu as pltpu

# ----------------------------- config --------------------------------------
INPUT_DIM = 16            # D
KERNEL_SIZE = 2           # K
CONV_CH = 4               # out_channels of conv1
HIDDEN = 16               # fc1 output
OUTPUT_DIM = 2            # fc2 output

CONV_L = INPUT_DIM - KERNEL_SIZE + 1      # 15
FLAT_DIM = CONV_CH * CONV_L               # 60
AUG_DIM = INPUT_DIM + 1                   # x rows + ones row (conv-bias fold)

BATCH = 512               # demo batch
B_TILE_MAX = 2048         # max lanes per grid step (VMEM-safe on all chips)


# ----------------------------- kernel ---------------------------------------
def convnet_kernel(x_ref, wconv_ref, w1_ref, w2_ref, bfc_ref, o_ref):
    # x_ref    : (AUG_DIM, Bt)    f32  VMEM   x^T with a trailing ones row
    # wconv_ref: (FLAT, AUG_DIM)  f32  VMEM   Toeplitz conv weight + bias col
    # w1_ref   : (HID, FLAT)      f32  VMEM   fc1 weight (PyTorch layout)
    # w2_ref   : (OUT, HID)       f32  VMEM   fc2 weight (PyTorch layout)
    # bfc_ref  : (HID + OUT, 1)   f32  VMEM   packed fc1/fc2 biases
    # o_ref    : (OUT, Bt)        f32  VMEM   lane-dense output tile
    x = x_ref[...]

    # Conv1d(1->C, K) + bias + channel-major flatten + ReLU: one MXU matmul.
    flat = jnp.dot(wconv_ref[...], x, preferred_element_type=jnp.float32)
    flat = jnp.maximum(flat, 0.0)                          # (FLAT, Bt)

    # fc1 + ReLU  (bias is a (HID,1) sublane broadcast)
    h = jnp.dot(w1_ref[...], flat, preferred_element_type=jnp.float32)
    h = jnp.maximum(h + bfc_ref[0:HIDDEN, :], 0.0)         # (HID, Bt)

    # fc2  (output stays batch-on-lanes: dense 128-lane stores)
    o = jnp.dot(w2_ref[...], h, preferred_element_type=jnp.float32)
    o_ref[...] = o + bfc_ref[HIDDEN:HIDDEN + OUTPUT_DIM, :]  # (OUT, Bt)


# ----------------------------- param prep (once) -----------------------------
def _round_up(n, m):
    return ((n + m - 1) // m) * m


def prepare_params(params):
    """Convert PyTorch-layout params into kernel layout.  Call ONCE, reuse."""
    wc, bc, w1, b1, w2, b2 = params

    # Toeplitz weight for the transposed dataflow:
    #   flat[c*L + l, b] = sum_k wc[c, k] * x[l + k, b] + bc[c]
    # W[c*L + l, l + k] = wc[c, k];  W[c*L + l, D] = bc[c]  (ones-row column)
    W = jnp.zeros((FLAT_DIM, AUG_DIM), jnp.float32)
    l = jnp.arange(CONV_L)
    for c in range(CONV_CH):
        for k in range(KERNEL_SIZE):
            W = W.at[c * CONV_L + l, l + k].set(wc[c, k])
        W = W.at[c * CONV_L + l, INPUT_DIM].set(bc[c])

    # fc weights stay (out, in); biases packed into a single (HID+OUT, 1) col.
    bfc = jnp.concatenate([jnp.asarray(b1).reshape(-1),
                           jnp.asarray(b2).reshape(-1)]).reshape(-1, 1)

    return (W,
            jnp.asarray(w1, jnp.float32),
            jnp.asarray(w2, jnp.float32),
            bfc.astype(jnp.float32))


# ----------------------------- wrapper ---------------------------------------
def convnet_forward(x, kparams, *, b_tile_max=B_TILE_MAX):
    wconv, w1, w2, bfc = kparams
    B, D = x.shape
    assert D == INPUT_DIM

    # Batch goes on the lane axis: pad to a multiple of 128 (lane-dense).
    Bp = _round_up(max(B, 128), 128)
    if Bp <= 128:
        bt = Bp                                   # single step, tiny batch
    else:
        # >=2 steps (both v7x TCs busy), tiles <= b_tile_max, lane-aligned.
        bt = min(_round_up(b_tile_max, 128), _round_up(Bp // 2, 128))
        Bp = _round_up(Bp, bt)
    grid = (Bp // bt,)

    # Transposed, ones-augmented input (AUG_DIM, Bp).  One cheap XLA reshape;
    # the ones row folds the conv bias into the Toeplitz matmul.
    x_aug = jnp.concatenate(
        [x.T.astype(jnp.float32), jnp.ones((1, B), jnp.float32)], axis=0)
    if Bp != B:
        x_aug = jnp.pad(x_aug, ((0, 0), (0, Bp - B)))

    def const(shape):
        # Full-array resident block, same block index every grid step.
        return pl.BlockSpec(shape, lambda i: (0, 0))

    out_t = pl.pallas_call(
        convnet_kernel,
        out_shape=jax.ShapeDtypeStruct((OUTPUT_DIM, Bp), jnp.float32),
        grid=grid,
        in_specs=[
            pl.BlockSpec((AUG_DIM, bt), lambda i: (0, i)),  # x^T: lane-tiled
            const(wconv.shape),                             # (FLAT, AUG)
            const(w1.shape),                                # (HID, FLAT)
            const(w2.shape),                                # (OUT, HID)
            const(bfc.shape),                               # (HID+OUT, 1)
        ],
        out_specs=pl.BlockSpec((OUTPUT_DIM, bt), lambda i: (0, i)),
        compiler_params=pltpu.CompilerParams(
            dimension_semantics=("parallel",)),             # both TCs on v7x
    )(x_aug, wconv, w1, w2, bfc)

    # Back to PyTorch orientation (B, OUTPUT_DIM); drop lane padding.
    return out_t[:, :B].T


# ----------------------------- reference -------------------------------------
def convnet_reference(x, params):
    wc, bc, w1, b1, w2, b2 = params
    cols = jnp.stack([x[:, k:k + CONV_L] for k in range(KERNEL_SIZE)],
                     axis=-1)                                   # (B, L, K)
    conv = jnp.einsum('blk,ck->bcl', cols, wc) + bc[None, :, None]
    conv = jnp.maximum(conv, 0.0)
    flat = conv.reshape(x.shape[0], -1)                         # (B, C*L)
    h = jnp.maximum(flat @ w1.T + b1, 0.0)
    return h @ w2.T + b2


# ----------------------------- params ----------------------------------------
def init_params(key):
    k1, k2, k3, k4, k5, k6 = jax.random.split(key, 6)
    wc = jax.random.normal(k1, (CONV_CH, KERNEL_SIZE), jnp.float32) * 0.5
    bc = jax.random.normal(k2, (CONV_CH,), jnp.float32) * 0.1
    w1 = jax.random.normal(k3, (HIDDEN, FLAT_DIM), jnp.float32) * 0.1
    b1 = jax.random.normal(k4, (HIDDEN,), jnp.float32) * 0.1
    w2 = jax.random.normal(k5, (OUTPUT_DIM, HIDDEN), jnp.float32) * 0.1
    b2 = jax.random.normal(k6, (OUTPUT_DIM,), jnp.float32) * 0.1
    return wc, bc, w1, b1, w2, b2


if __name__ == "__main__":
    key = jax.random.PRNGKey(0)
    kx, kp = jax.random.split(key)
    x = jax.random.normal(kx, (BATCH, INPUT_DIM), jnp.float32)
    params = init_params(kp)

    kparams = prepare_params(params)          # layout prep: done once

    out = convnet_forward(x, kparams)
    out = jax.block_until_ready(out)

    ref = convnet_reference(x, params)
    assert out.shape == (BATCH, OUTPUT_DIM)
    assert jnp.allclose(out, ref, atol=1e-4, rtol=1e-4), (out, ref)

    print("KERNEL_OK")
</pallas_src>

<mosaic_0001>
module attributes {stable_mosaic.version = 11 : i64} {
  func.func @convnet_kernel(%arg0: i32, %arg1: memref<17x256xf32, #tpu.memory_space<vmem>>, %arg2: memref<60x17xf32, #tpu.memory_space<vmem>>, %arg3: memref<16x60xf32, #tpu.memory_space<vmem>>, %arg4: memref<2x16xf32, #tpu.memory_space<vmem>>, %arg5: memref<18x1xf32, #tpu.memory_space<vmem>>, %arg6: memref<2x256xf32, #tpu.memory_space<vmem>>) attributes {dimension_semantics = [#tpu.dimension_semantics<parallel>], iteration_bounds = array<i64: 2>, scalar_prefetch = 0 : i64, scratch_operands = 0 : i64, tpu.core_type = #tpu.core_type<tc>, window_params = [{transform_indices = @transform_0, window_bounds = array<i64: 17, 256>}, {pipeline_mode = #tpu.pipeline_mode<synchronous>, transform_indices = @transform_1, window_bounds = array<i64: 60, 17>}, {pipeline_mode = #tpu.pipeline_mode<synchronous>, transform_indices = @transform_2, window_bounds = array<i64: 16, 60>}, {pipeline_mode = #tpu.pipeline_mode<synchronous>, transform_indices = @transform_3, window_bounds = array<i64: 2, 16>}, {pipeline_mode = #tpu.pipeline_mode<synchronous>, transform_indices = @transform_4, window_bounds = array<i64: 18, 1>}, {transform_indices = @transform_5, window_bounds = array<i64: 2, 256>}]} {
    %c0 = arith.constant 0 : index
    %c0_0 = arith.constant 0 : index
    %0 = vector.load %arg1[%c0, %c0_0] : memref<17x256xf32, #tpu.memory_space<vmem>>, vector<17x256xf32>
    %c0_1 = arith.constant 0 : index
    %c0_2 = arith.constant 0 : index
    %1 = vector.load %arg2[%c0_1, %c0_2] : memref<60x17xf32, #tpu.memory_space<vmem>>, vector<60x17xf32>
    %cst = arith.constant dense<0.000000e+00> : vector<60x256xf32>
    %2 = tpu.matmul %1, %0, %cst {dimension_numbers = #tpu.dot_dimension_numbers<[1], [0], [0], [1], [0, 0, 1, 1], [], []>} : vector<60x17xf32>, vector<17x256xf32>, vector<60x256xf32> -> vector<60x256xf32>
    %cst_3 = arith.constant 0.000000e+00 : f32
    %3 = vector.broadcast %cst_3 : f32 to vector<60x256xf32>
    %4 = arith.maximumf %2, %3 : vector<60x256xf32>
    %c0_4 = arith.constant 0 : index
    %c0_5 = arith.constant 0 : index
    %5 = vector.load %arg3[%c0_4, %c0_5] : memref<16x60xf32, #tpu.memory_space<vmem>>, vector<16x60xf32>
    %cst_6 = arith.constant dense<0.000000e+00> : vector<16x256xf32>
    %6 = tpu.matmul %5, %4, %cst_6 {dimension_numbers = #tpu.dot_dimension_numbers<[1], [0], [0], [1], [0, 0, 1, 1], [], []>} : vector<16x60xf32>, vector<60x256xf32>, vector<16x256xf32> -> vector<16x256xf32>
    %c0_7 = arith.constant 0 : index
    %c0_8 = arith.constant 0 : index
    %7 = vector.load %arg5[%c0_7, %c0_8] : memref<18x1xf32, #tpu.memory_space<vmem>>, vector<16x1xf32>
    %8 = vector.broadcast %7 : vector<16x1xf32> to vector<16x256xf32>
    %9 = arith.addf %6, %8 : vector<16x256xf32>
    %cst_9 = arith.constant 0.000000e+00 : f32
    %10 = vector.broadcast %cst_9 : f32 to vector<16x256xf32>
    %11 = arith.maximumf %9, %10 : vector<16x256xf32>
    %c0_10 = arith.constant 0 : index
    %c0_11 = arith.constant 0 : index
    %12 = vector.load %arg4[%c0_10, %c0_11] : memref<2x16xf32, #tpu.memory_space<vmem>>, vector<2x16xf32>
    %cst_12 = arith.constant dense<0.000000e+00> : vector<2x256xf32>
    %13 = tpu.matmul %12, %11, %cst_12 {dimension_numbers = #tpu.dot_dimension_numbers<[1], [0], [0], [1], [0, 0, 1, 1], [], []>} : vector<2x16xf32>, vector<16x256xf32>, vector<2x256xf32> -> vector<2x256xf32>
    %c16 = arith.constant 16 : index
    %c0_13 = arith.constant 0 : index
    %14 = vector.load %arg5[%c16, %c0_13] : memref<18x1xf32, #tpu.memory_space<vmem>>, vector<2x1xf32>
    %15 = vector.broadcast %14 : vector<2x1xf32> to vector<2x256xf32>
    %16 = arith.addf %13, %15 : vector<2x256xf32>
    %c0_14 = arith.constant 0 : index
    %c0_15 = arith.constant 0 : index
    %17 = vector.load %arg6[%c0_14, %c0_15] : memref<2x256xf32, #tpu.memory_space<vmem>>, vector<2x256xf32>
    tpu.vector_store %arg6[%c0_14, %c0_15], %16 {strides = array<i32>} : memref<2x256xf32, #tpu.memory_space<vmem>>, vector<2x256xf32>,
    return
  }
  func.func @transform_0(%arg0: i32) -> (i32, i32) {
    %c0_i32 = arith.constant 0 : i32
    %c0_i32_0 = arith.constant 0 : i32
    return %c0_i32, %arg0 : i32, i32
  }
  func.func @transform_1(%arg0: i32) -> (i32, i32) {
    %c0_i32 = arith.constant 0 : i32
    %c0_i32_0 = arith.constant 0 : i32
    %c0_i32_1 = arith.constant 0 : i32
    return %c0_i32, %c0_i32_0 : i32, i32
  }
  func.func @transform_2(%arg0: i32) -> (i32, i32) {
    %c0_i32 = arith.constant 0 : i32
    %c0_i32_0 = arith.constant 0 : i32
    %c0_i32_1 = arith.constant 0 : i32
    return %c0_i32, %c0_i32_0 : i32, i32
  }
  func.func @transform_3(%arg0: i32) -> (i32, i32) {
    %c0_i32 = arith.constant 0 : i32
    %c0_i32_0 = arith.constant 0 : i32
    %c0_i32_1 = arith.constant 0 : i32
    return %c0_i32, %c0_i32_0 : i32, i32
  }
  func.func @transform_4(%arg0: i32) -> (i32, i32) {
    %c0_i32 = arith.constant 0 : i32
    %c0_i32_0 = arith.constant 0 : i32
    %c0_i32_1 = arith.constant 0 : i32
    return %c0_i32, %c0_i32_0 : i32, i32
  }
  func.func @transform_5(%arg0: i32) -> (i32, i32) {
    %c0_i32 = arith.constant 0 : i32
    %c0_i32_0 = arith.constant 0 : i32
    return %c0_i32, %arg0 : i32, i32
  }
}

</mosaic_0001>

<llo_original>
// kernel: tpu_custom_call.1
$region0: #{tpu_custom_call.1}
  #allocation0 [shape = 'u32[]', space=smem, size = 0x4, offset = 0x4, fixed_abs, tag = 'smem constant byte address 0x4 - core index']
  #allocation1 [shape = 'u32[144,128]{1,0:T(1,128)}', space=vmem, size = 0x12000, scoped, tag = 'internal scratch']
  %s0 = inlined_call_operand.vmem [shape: f32[17,512], index: 0, kind: input, shape index: {}]
  %s1 = inlined_call_operand.vmem [shape: f32[60,17], index: 1, kind: input, shape index: {}]
  %s2 = inlined_call_operand.vmem [shape: f32[16,60], index: 2, kind: input, shape index: {}]
  %s3 = inlined_call_operand.vmem [shape: f32[2,16], index: 3, kind: input, shape index: {}]
  %s4 = inlined_call_operand.vmem [shape: f32[18,1], index: 4, kind: input, shape index: {}]
  %s5 = inlined_call_operand.hbm [shape: f32[2,512], index: 5, kind: output, shape index: {}]
  %s6 = sld [smem:[#allocation0]]
  $region76: #{tpu_custom_call.1} parent=0
    _
  %s8 = ssub.s32 1, %s6
  %s9 = scalar_select 0, %s8, %s6
  $region1: #{tpu_custom_call.1} parent=0
    #allocation2 [shape = 'u8[49152]{0}', space=vmem, size = 0xc000, scoped, tag = 'input window, operand 0']
    #allocation3 [shape = 'u8[4096]{0}', space=vmem, size = 0x1000, scoped, tag = 'output window, operand 0']
    #allocation4 [shape = 's32[2]{0}', space=sflag, size = 0x8, scoped, tag = 'scoped memory for tpu_custom_call.1']
    %10 = vsyncpa [#allocation4], 0
    %s11 = scalar_lea.sflag [#allocation4], 1
    %12 = vsyncpa %s11, 0
    loop: start=0, step=1, limit=4
    $region2: #{tpu_custom_call.1} parent=1 // loop_pre_header
      _
    $region3: #{tpu_custom_call.1} parent=1 // loop_header
      %s14 = sphi 0, %s18
      %p15 = scmp.ge.s32.totalorder %s14, 4
      %s24 = sphi 0, %s26
      %s27 = sphi 0, %s24
      %s28 = sphi 0, %s27
      %s44 = sphi 0, %s28
      %s48 = sphi 0, %s48
      %s50 = sphi 0, %s48
      %s51 = sphi 0, %s50
      %s65 = sphi 0, %s51
      %s69 = sphi 0, %s69
      %s71 = sphi 0, %s69
      %s72 = sphi 0, %s71
      %s86 = sphi 0, %s72
      %s90 = sphi 0, %s90
      %s92 = sphi 0, %s90
      %s93 = sphi 0, %s92
      %s107 = sphi 0, %s93
      %s111 = sphi 0, %s111
      %s113 = sphi 0, %s111
      %s114 = sphi 0, %s113
      %s128 = sphi 0, %s114
      %s134 = sphi 0, %s136
      %s137 = sphi 0, %s134
      %s138 = sphi 0, %s137
      %s154 = sphi 0, %s138
    $region4: #{tpu_custom_call.1} parent=1 // loop_header_branch
      %17 = sbr.rel (%p15) target = $region8
    $region5: #{tpu_custom_call.1} parent=1 // loop_body
      %s19 = ssub.s32 %s14, 1
      %s20 = ssub.s32 %s14, 2
      %s21 = sadd.s32 %s14, 1
      %s22 = ssub.s32 %s14, %s21
      %p23 = scmp.eq.s32.totalorder %s22, 0
      %s25 = sadd.s32 %s24, 1
      %s26 = scalar_select %p23, %s24, %s25
      %p29 = pneg %p23
      %p30 = scmp.eq.s32.totalorder %s14, 1
      %p31 = por %p29, %p30
      %p32 = scmp.ne.s32.totalorder %s24, %s27
      %p33 = scmp.eq.s32.totalorder %s14, 0
      %p34 = por %p32, %p33
      %p35 = scmp.ne.s32.totalorder %s24, %s27
      %p36 = scmp.eq.s32.totalorder %s19, 1
      %p37 = por %p35, %p36
      %p38 = scmp.ne.s32.totalorder %s27, %s28
      %p39 = scmp.eq.s32.totalorder %s19, 0
      %p40 = por %p38, %p39
      %p41 = scmp.ne.s32.totalorder %s27, %s28
      %p42 = scmp.eq.s32.totalorder %s20, 1
      %p43 = por %p41, %p42
      %p45 = scmp.ne.s32.totalorder %s28, %s44
      %p46 = scmp.eq.s32.totalorder %s20, 0
      %p47 = por %p45, %p46
      %s49 = sadd.s32 %s48, 1
      %p52 = scmp.eq.s32.totalorder %s14, 1
      %p53 = scmp.ne.s32.totalorder %s48, %s50
      %p54 = scmp.eq.s32.totalorder %s14, 0
      %p55 = por %p53, %p54
      %p56 = scmp.ne.s32.totalorder %s48, %s50
      %p57 = scmp.eq.s32.totalorder %s19, 1
      %p58 = por %p56, %p57
      %p59 = scmp.ne.s32.totalorder %s50, %s51
      %p60 = scmp.eq.s32.totalorder %s19, 0
      %p61 = por %p59, %p60
      %p62 = scmp.ne.s32.totalorder %s50, %s51
      %p63 = scmp.eq.s32.totalorder %s20, 1
      %p64 = por %p62, %p63
      %p66 = scmp.ne.s32.totalorder %s51, %s65
      %p67 = scmp.eq.s32.totalorder %s20, 0
      %p68 = por %p66, %p67
      %s70 = sadd.s32 %s69, 1
      %p73 = scmp.eq.s32.totalorder %s14, 1
      %p74 = scmp.ne.s32.totalorder %s69, %s71
      %p75 = scmp.eq.s32.totalorder %s14, 0
      %p76 = por %p74, %p75
      %p77 = scmp.ne.s32.totalorder %s69, %s71
      %p78 = scmp.eq.s32.totalorder %s19, 1
      %p79 = por %p77, %p78
      %p80 = scmp.ne.s32.totalorder %s71, %s72
      %p81 = scmp.eq.s32.totalorder %s19, 0
      %p82 = por %p80, %p81
      %p83 = scmp.ne.s32.totalorder %s71, %s72
      %p84 = scmp.eq.s32.totalorder %s20, 1
      %p85 = por %p83, %p84
      %p87 = scmp.ne.s32.totalorder %s72, %s86
      %p88 = scmp.eq.s32.totalorder %s20, 0
      %p89 = por %p87, %p88
      %s91 = sadd.s32 %s90, 1
      %p94 = scmp.eq.s32.totalorder %s14, 1
      %p95 = scmp.ne.s32.totalorder %s90, %s92
      %p96 = scmp.eq.s32.totalorder %s14, 0
      %p97 = por %p95, %p96
      %p98 = scmp.ne.s32.totalorder %s90, %s92
      %p99 = scmp.eq.s32.totalorder %s19, 1
      %p100 = por %p98, %p99
      %p101 = scmp.ne.s32.totalorder %s92, %s93
      %p102 = scmp.eq.s32.totalorder %s19, 0
      %p103 = por %p101, %p102
      %p104 = scmp.ne.s32.totalorder %s92, %s93
      %p105 = scmp.eq.s32.totalorder %s20, 1
      %p106 = por %p104, %p105
      %p108 = scmp.ne.s32.totalorder %s93, %s107
      %p109 = scmp.eq.s32.totalorder %s20, 0
      %p110 = por %p108, %p109
      %s112 = sadd.s32 %s111, 1
      %p115 = scmp.eq.s32.totalorder %s14, 1
      %p116 = scmp.ne.s32.totalorder %s111, %s113
      %p117 = scmp.eq.s32.totalorder %s14, 0
      %p118 = por %p116, %p117
      %p119 = scmp.ne.s32.totalorder %s111, %s113
      %p120 = scmp.eq.s32.totalorder %s19, 1
      %p121 = por %p119, %p120
      %p122 = scmp.ne.s32.totalorder %s113, %s114
      %p123 = scmp.eq.s32.totalorder %s19, 0
      %p124 = por %p122, %p123
      %p125 = scmp.ne.s32.totalorder %s113, %s114
      %p126 = scmp.eq.s32.totalorder %s20, 1
      %p127 = por %p125, %p126
      %p129 = scmp.ne.s32.totalorder %s114, %s128
      %p130 = scmp.eq.s32.totalorder %s20, 0
      %p131 = por %p129, %p130
      %s132 = ssub.s32 %s14, %s21
      %p133 = scmp.eq.s32.totalorder %s132, 0
      %s135 = sadd.s32 %s134, 1
      %s136 = scalar_select %p133, %s134, %s135
      %p139 = pneg %p133
      %p140 = scmp.eq.s32.totalorder %s14, 1
      %p141 = por %p139, %p140
      %p142 = scmp.ne.s32.totalorder %s134, %s137
      %p143 = scmp.eq.s32.totalorder %s14, 0
      %p144 = por %p142, %p143
      %p145 = scmp.ne.s32.totalorder %s134, %s137
      %p146 = scmp.eq.s32.totalorder %s19, 1
      %p147 = por %p145, %p146
      %p148 = scmp.ne.s32.totalorder %s137, %s138
      %p149 = scmp.eq.s32.totalorder %s19, 0
      %p150 = por %p148, %p149
      %p151 = scmp.ne.s32.totalorder %s137, %s138
      %p152 = scmp.eq.s32.totalorder %s20, 1
      %p153 = por %p151, %p152
      %p155 = scmp.ne.s32.totalorder %s138, %s154
      %p156 = scmp.eq.s32.totalorder %s20, 0
      %p157 = por %p155, %p156
      %p158 = scmp.le.s32.totalorder 1, %s14
      %p159 = scmp.lt.s32.totalorder %s14, 3
      %p160 = pnand %p158, %p159
      %p161 = pneg %p160
      // Predicated region
      $region9: #{tpu_custom_call.1} parent=5 // pred_check
        _
      $region10: #{tpu_custom_call.1} parent=5 // pred_check_branch
        %163 = sbr.rel (%p160) target = $region12
      $region11: #{tpu_custom_call.1} parent=5 // pred_region
        %s164 = ssub.s32 %s14, 1
        // Predicated region
        $region13: #{tpu_custom_call.1} parent=11 // pred_check
          %p165 = pneg %p61
        $region14: #{tpu_custom_call.1} parent=11 // pred_check_branch
          %167 = sbr.rel (%p165) target = $region16
        $region15: #{tpu_custom_call.1} parent=11 // pred_region
          _
        $region16: #{tpu_custom_call.1} parent=11 // pred_fallthru
          _
        // Predicated region
        $region17: #{tpu_custom_call.1} parent=11 // pred_check
          %p168 = pneg %p82
        $region18: #{tpu_custom_call.1} parent=11 // pred_check_branch
          %170 = sbr.rel (%p168) target = $region20
        $region19: #{tpu_custom_call.1} parent=11 // pred_region
          _
        $region20: #{tpu_custom_call.1} parent=11 // pred_fallthru
          _
        // Predicated region
        $region21: #{tpu_custom_call.1} parent=11 // pred_check
          %p171 = pneg %p103
        $region22: #{tpu_custom_call.1} parent=11 // pred_check_branch
          %173 = sbr.rel (%p171) target = $region24
        $region23: #{tpu_custom_call.1} parent=11 // pred_region
          _
        $region24: #{tpu_custom_call.1} parent=11 // pred_fallthru
          _
        // Predicated region
        $region25: #{tpu_custom_call.1} parent=11 // pred_check
          %p174 = pneg %p124
        $region26: #{tpu_custom_call.1} parent=11 // pred_check_branch
          %176 = sbr.rel (%p174) target = $region28
        $region27: #{tpu_custom_call.1} parent=11 // pred_region
          _
        $region28: #{tpu_custom_call.1} parent=11 // pred_fallthru
          _
      $region12: #{tpu_custom_call.1} parent=5 // pred_fallthru
        _
      %p177 = scmp.lt.s32.totalorder %s14, 2
      // Predicated region
      $region29: #{tpu_custom_call.1} parent=5 // pred_check
        %p178 = pneg %p177
      $region30: #{tpu_custom_call.1} parent=5 // pred_check_branch
        %180 = sbr.rel (%p178) target = $region32
      $region31: #{tpu_custom_call.1} parent=5 // pred_region
        // Predicated region
        $region33: #{tpu_custom_call.1} parent=31 // pred_check
          %p181 = pneg %p34
        $region34: #{tpu_custom_call.1} parent=31 // pred_check_branch
          %183 = sbr.rel (%p181) target = $region36
        $region35: #{tpu_custom_call.1} parent=31 // pred_region
          %s184 = sand.u32 %s24, 1
          %s185 = sand.u32 %s24, 1
          %s186 = smul.addr %s185, 48
          %s187 = scalar_lea.vmem [#allocation2], %s186
          %s188 = smul.u32 2, %s14
          %s189 = smul.addr %s188, 8
          %s190 = scalar_lea.vmem %s0, %s189
          // Predicated region
          $region37: #{tpu_custom_call.1} parent=35 // pred_check
            _
          $region38: #{tpu_custom_call.1} parent=35 // pred_check_branch
            %192 = sbr.rel (0) target = $region40
          $region39: #{tpu_custom_call.1} parent=35 // pred_region
            // Predicated region
            $region41: #{tpu_custom_call.1} parent=39 // pred_check
              _
            $region42: #{tpu_custom_call.1} parent=39 // pred_check_branch
              %194 = sbr.rel (0) target = $region44
            $region43: #{tpu_custom_call.1} parent=39 // pred_region
              loop: start=0, step=1, limit=1
              $region45: #{tpu_custom_call.1} parent=43 // loop_pre_header
                _
              $region46: #{tpu_custom_call.1} parent=43 // loop_header
                %s196 = sphi 0, %s200
                %p197 = scmp.ge.s32.totalorder %s196, 1
                %s201 = sphi %s190, %s190
                %s202 = sphi %s187, %s187
              $region47: #{tpu_custom_call.1} parent=43 // loop_header_branch
                %199 = sbr.rel (%p197) target = $region51
              $region48: #{tpu_custom_call.1} parent=43 // loop_body
                %v203 = vld [vmem:[%s201] sm:$0xff]
                %204 = vst [vmem:[%s202] sm:$0xff] %v203
                %v205 = vld [vmem:[%s201 + $0x8] sm:$0xff]
                %206 = vst [vmem:[%s202 + $0x8] sm:$0xff] %v205
                %v207 = vld [vmem:[%s201 + $0x20] sm:$0xff]
                %208 = vst [vmem:[%s202 + $0x10] sm:$0xff] %v207
                %v209 = vld [vmem:[%s201 + $0x28] sm:$0xff]
                %210 = vst [vmem:[%s202 + $0x18] sm:$0xff] %v209
                %v211 = vld [vmem:[%s201 + $0x40] sm:$0xff]
                %212 = vst [vmem:[%s202 + $0x20] sm:$0xff] %v211
                %v213 = vld [vmem:[%s201 + $0x48] sm:$0xff]
                %214 = vst [vmem:[%s202 + $0x28] sm:$0xff] %v213
              $region49: #{tpu_custom_call.1} parent=43 // loop_footer
                %s200 = sadd.s32 1, %s196
              $region50: #{tpu_custom_call.1} parent=43 // loop_footer_branch
                %195 = sbr.rel target = $region46
              $region51: #{tpu_custom_call.1} parent=43 // loop_exit
                _
            $region44: #{tpu_custom_call.1} parent=39 // pred_fallthru
              _
            // Predicated region
            $region52: #{tpu_custom_call.1} parent=39 // pred_check
              _
            $region53: #{tpu_custom_call.1} parent=39 // pred_check_branch
              %216 = sbr.rel target = $region55
            $region54: #{tpu_custom_call.1} parent=39 // pred_region
              _
            $region55: #{tpu_custom_call.1} parent=39 // pred_fallthru
              _
          $region40: #{tpu_custom_call.1} parent=35 // pred_fallthru
            _
          %217 = vnop
        $region36: #{tpu_custom_call.1} parent=31 // pred_fallthru
          _
      $region32: #{tpu_custom_call.1} parent=5 // pred_fallthru
        _
      %p218 = scmp.le.s32.totalorder 1, %s14
      %p219 = scmp.lt.s32.totalorder %s14, 3
      %p220 = pnand %p218, %p219
      %p221 = pneg %p220
      // Predicated region
      $region56: #{tpu_custom_call.1} parent=5 // pred_check
        _
      $region57: #{tpu_custom_call.1} parent=5 // pred_check_branch
        %223 = sbr.rel (%p220) target = $region59
      $region58: #{tpu_custom_call.1} parent=5 // pred_region
        %s224 = ssub.s32 %s14, 1
        %s225 = sand.u32 %s27, 1
        %s226 = sand.u32 %s27, 1
        %s227 = smul.addr %s226, 48
        %s228 = scalar_lea.vmem [#allocation2], %s227
        // Predicated region
        $region60: #{tpu_custom_call.1} parent=58 // pred_check
          %p229 = pneg %p40
        $region61: #{tpu_custom_call.1} parent=58 // pred_check_branch
          %231 = sbr.rel (%p229) target = $region63
        $region62: #{tpu_custom_call.1} parent=58 // pred_region
          _
        $region63: #{tpu_custom_call.1} parent=58 // pred_fallthru
          _
        %s232 = sand.u32 %s27, 1
        %s233 = sand.u32 %s27, 1
        %s234 = smul.addr %s233, 48
        %s235 = scalar_lea.vmem [#allocation2], %s234
        %p236 = pneg %p40
        %p237 = pneg %p37
        %p238 = pneg %p61
        %p239 = pneg %p58
        %p240 = pneg %p82
        %p241 = pneg %p79
        %p242 = pneg %p103
        %p243 = pneg %p100
        %p244 = pneg %p124
        %p245 = pneg %p121
        %p246 = pneg %p150
        %p247 = pneg %p147
        %s248 = sand.u32 %s137, 1
        %s249 = scalar_lea.sflag [#allocation4], %s248
        %s250 = sand.u32 %s137, 1
        %s251 = smul.addr %s250, 4
        %s252 = scalar_lea.vmem [#allocation3], %s251
        %s253 = smul.u32 2, %s19
        %s254 = smul.u32 2, %s19
        %v255 = vld [vmem:[%s228] sm:$0xff]
        %v256 = vld [vmem:[%s228 + $0x8] sm:$0xff]
        %v257 = vld [vmem:[%s228 + $0x10] sm:$0xff]
        %v258 = vld [vmem:[%s228 + $0x18] sm:$0xff]
        %v259 = vld [vmem:[%s228 + $0x20] sm:$0x1]
        %v260 = vld [vmem:[%s228 + $0x28] sm:$0x1]
        %v261 = vld [vmem:[%s1] sm:$0xff]
        %v262 = vld [vmem:[%s1 + $0x8] sm:$0xff]
        %v263 = vld [vmem:[%s1 + $0x10] sm:$0xff]
        %v264 = vld [vmem:[%s1 + $0x18] sm:$0xff]
        %v265 = vld [vmem:[%s1 + $0x20] sm:$0xff]
        %v266 = vld [vmem:[%s1 + $0x28] sm:$0xff]
        %v267 = vld [vmem:[%s1 + $0x30] sm:$0xff]
        %v268 = vld [vmem:[%s1 + $0x38] sm:$0xf]
        %vm269 = vcmask 138240
        %v271 = vsel %vm269, %v261, 0
        %v274 = vsel %vm269, %v262, 0
        %v277 = vsel %vm269, %v263, 0
        %v280 = vsel %vm269, %v264, 0
        %v283 = vsel %vm269, %v265, 0
        %v286 = vsel %vm269, %v266, 0
        %v289 = vsel %vm269, %v267, 0
        %v292 = vsel %vm269, %v268, 0
        %vm294 = vcmask 1040384
        %v296 = vsel %vm294, %v259, 0
        %v299 = vsel %vm294, %v260, 0
        %301 = vmatprep.subr.mxu0 %v256
        %302 = vmatpush1.msra.mxu0 %v255
        %303 = vmatprep.subr.mxu0 %v258
        %304 = vmatpush1.msra.mxu0 %v257
        %305 = vmatprep.subr.mxu0 %v299
        %306 = vmatpush1.msra.mxu0 %v296
        %307 = vmatprep.subr.mxu0 0.0
        %308 = vmatpush1.msra.mxu0 0.0
        %309 = vmatprep.subr.mxu0 0.0
        %310 = vmatpush1.msra.mxu0 0.0
        %311 = vmatprep.subr.mxu0 0.0
        %312 = vmatpush1.msra.mxu0 0.0
        %313 = vmatprep.subr.mxu0 0.0
        %314 = vmatpush1.msra.mxu0 0.0
        %315 = vmatprep.subr.mxu0 0.0
        %316 = vmatpush1.msra.mxu0 0.0
        %317 = vmatprep.subr.mxu0 0.0
        %318 = vmatpush1.msra.mxu0 0.0
        %319 = vmatprep.subr.mxu0 0.0
        %320 = vmatpush1.msra.mxu0 0.0
        %321 = vmatprep.subr.mxu0 0.0
        %322 = vmatpush1.msra.mxu0 0.0
        %323 = vmatprep.subr.mxu0 0.0
        %324 = vmatpush1.msra.mxu0 0.0
        %325 = vmatprep.subr.mxu0 0.0
        %326 = vmatpush1.msra.mxu0 0.0
        %327 = vmatprep.subr.mxu0 0.0
        %328 = vmatpush1.msra.mxu0 0.0
        %329 = vmatprep.subr.mxu0 0.0
        %330 = vmatpush1.msra.mxu0 0.0
        %331 = vmatprep.subr.mxu0 0.0
        %332 = vmatpush1.msra.mxu0 0.0
        %333 = vmatprep.subr.mxu0 0.0
        %334 = vmatpush1.msra.mxu0 0.0
        %335 = vmatprep.subr.mxu0 0.0
        %336 = vmatpush1.msra.mxu0 0.0
        %337 = vmatprep.subr.mxu0 0.0
        %338 = vmatpush1.msra.mxu0 0.0
        %339 = vmatprep.subr.mxu0 0.0
        %340 = vmatpush1.msra.mxu0 0.0
        %341 = vmatprep.subr.mxu0 0.0
        %342 = vmatpush1.msra.mxu0 0.0
        %343 = vmatprep.subr.mxu0 0.0
        %344 = vmatpush1.msra.mxu0 0.0
        %345 = vmatprep.subr.mxu0 0.0
        %346 = vmatpush1.msra.mxu0 0.0
        %347 = vmatprep.subr.mxu0 0.0
        %348 = vmatpush1.msra.mxu0 0.0
        %349 = vmatprep.subr.mxu0 0.0
        %350 = vmatpush1.msra.mxu0 0.0
        %351 = vmatprep.subr.mxu0 0.0
        %352 = vmatpush1.msra.mxu0 0.0
        %353 = vmatprep.subr.mxu0 0.0
        %354 = vmatpush1.msra.mxu0 0.0
        %355 = vmatprep.subr.mxu0 0.0
        %356 = vmatpush1.msra.mxu0 0.0
        %357 = vmatprep.subr.mxu0 0.0
        %358 = vmatpush1.msra.mxu0 0.0
        %359 = vmatprep.subr.mxu0 0.0
        %360 = vmatpush1.msra.mxu0 0.0
        %361 = vmatprep.subr.mxu0 0.0
        %362 = vmatpush1.msra.mxu0 0.0
        %363 = vmatprep.subr.mxu0 0.0
        %364 = vmatpush1.msra.mxu0 0.0
        %365 = vmatprep.mubr.f32.mxu0 0.0
        %366 = vmatmul.mubr.f32.gmra.mrb[0].mxu0 %v271
        %v367 = vpop.f32.mrb[0].mxu0
        %v368 = vadd.f32 0.0, %v367
        %v369 = vpop.f32.mrb[0].mxu0
        %v370 = vadd.f32 0.0, %v369
        %371 = vmatprep.mubr.f32.mxu0 0.0
        %372 = vmatmul.mubr.f32.gmra.mrb[0].mxu0 %v274
        %v373 = vpop.f32.mrb[0].mxu0
        %v374 = vadd.f32 0.0, %v373
        %v375 = vpop.f32.mrb[0].mxu0
        %v376 = vadd.f32 0.0, %v375
        %377 = vmatprep.mubr.f32.mxu0 0.0
        %378 = vmatmul.mubr.f32.gmra.mrb[0].mxu0 %v277
        %v379 = vpop.f32.mrb[0].mxu0
        %v380 = vadd.f32 0.0, %v379
        %v381 = vpop.f32.mrb[0].mxu0
        %v382 = vadd.f32 0.0, %v381
        %383 = vmatprep.mubr.f32.mxu0 0.0
        %384 = vmatmul.mubr.f32.gmra.mrb[0].mxu0 %v280
        %v385 = vpop.f32.mrb[0].mxu0
        %v386 = vadd.f32 0.0, %v385
        %v387 = vpop.f32.mrb[0].mxu0
        %v388 = vadd.f32 0.0, %v387
        %389 = vmatprep.mubr.f32.mxu0 0.0
        %390 = vmatmul.mubr.f32.gmra.mrb[0].mxu0 %v283
        %v391 = vpop.f32.mrb[0].mxu0
        %v392 = vadd.f32 0.0, %v391
        %v393 = vpop.f32.mrb[0].mxu0
        %v394 = vadd.f32 0.0, %v393
        %395 = vmatprep.mubr.f32.mxu0 0.0
        %396 = vmatmul.mubr.f32.gmra.mrb[0].mxu0 %v286
        %v397 = vpop.f32.mrb[0].mxu0
        %v398 = vadd.f32 0.0, %v397
        %v399 = vpop.f32.mrb[0].mxu0
        %v400 = vadd.f32 0.0, %v399
        %401 = vmatprep.mubr.f32.mxu0 0.0
        %402 = vmatmul.mubr.f32.gmra.mrb[0].mxu0 %v289
        %v403 = vpop.f32.mrb[0].mxu0
        %v404 = vadd.f32 0.0, %v403
        %v405 = vpop.f32.mrb[0].mxu0
        %v406 = vadd.f32 0.0, %v405
        %407 = vmatprep.mubr.f32.mxu0 0.0
        %408 = vmatmul.mubr.f32.gmra.mrb[0].mxu0 %v292
        %v409 = vpop.f32.mrb[0].mxu0
        %v410 = vadd.f32 0.0, %v409
        %v411 = vpop.f32.mrb[0].mxu0
        %v412 = vadd.f32 0.0, %v411
        %413 = vdwg.mxu0
        %v414 = vmax.f32 %v368, 0.0
        %v415 = vmax.f32 %v370, 0.0
        %v416 = vmax.f32 %v374, 0.0
        %v417 = vmax.f32 %v376, 0.0
        %v418 = vmax.f32 %v380, 0.0
        %v419 = vmax.f32 %v382, 0.0
        %v420 = vmax.f32 %v386, 0.0
        %v421 = vmax.f32 %v388, 0.0
        %v422 = vmax.f32 %v392, 0.0
        %v423 = vmax.f32 %v394, 0.0
        %v424 = vmax.f32 %v398, 0.0
        %v425 = vmax.f32 %v400, 0.0
        %v426 = vmax.f32 %v404, 0.0
        %v427 = vmax.f32 %v406, 0.0
        %v428 = vmax.f32 %v410, 0.0
        %v429 = vmax.f32 %v412, 0.0
        %v430 = vld [vmem:[%s2] sm:$0xff]
        %v431 = vld [vmem:[%s2 + $0x8] sm:$0xff]
        %v432 = vld [vmem:[%s4] sm:$0xff]
        %v433 = vld [vmem:[%s4 + $0x8] sm:$0xff]
        %435 = vset.pattern.permute.xlu0 0
        %436 = vperm.xlu0 %435, %v432
        %v437 = vpop.permute.xlu0 %436
        %440 = vset.pattern.permute.xlu0 0
        %441 = vperm.xlu0 %440, %v433
        %v442 = vpop.permute.xlu0 %441
        %vm444 = vcmask 490496
        %v446 = vsel %vm444, %v430, 0
        %v449 = vsel %vm444, %v431, 0
        %vm451 = vcmask 1043456
        %v453 = vsel %vm451, %v428, 0
        %v456 = vsel %vm451, %v429, 0
        %458 = vmatprep.subr.mxu0 %v415
        %459 = vmatpush1.msra.mxu0 %v414
        %460 = vmatprep.subr.mxu0 %v417
        %461 = vmatpush1.msra.mxu0 %v416
        %462 = vmatprep.subr.mxu0 %v419
        %463 = vmatpush1.msra.mxu0 %v418
        %464 = vmatprep.subr.mxu0 %v421
        %465 = vmatpush1.msra.mxu0 %v420
        %466 = vmatprep.subr.mxu0 %v423
        %467 = vmatpush1.msra.mxu0 %v422
        %468 = vmatprep.subr.mxu0 %v425
        %469 = vmatpush1.msra.mxu0 %v424
        %470 = vmatprep.subr.mxu0 %v427
        %471 = vmatpush1.msra.mxu0 %v426
        %472 = vmatprep.subr.mxu0 %v456
        %473 = vmatpush1.msra.mxu0 %v453
        %474 = vmatprep.subr.mxu0 0.0
        %475 = vmatpush1.msra.mxu0 0.0
        %476 = vmatprep.subr.mxu0 0.0
        %477 = vmatpush1.msra.mxu0 0.0
        %478 = vmatprep.subr.mxu0 0.0
        %479 = vmatpush1.msra.mxu0 0.0
        %480 = vmatprep.subr.mxu0 0.0
        %481 = vmatpush1.msra.mxu0 0.0
        %482 = vmatprep.subr.mxu0 0.0
        %483 = vmatpush1.msra.mxu0 0.0
        %484 = vmatprep.subr.mxu0 0.0
        %485 = vmatpush1.msra.mxu0 0.0
        %486 = vmatprep.subr.mxu0 0.0
        %487 = vmatpush1.msra.mxu0 0.0
        %488 = vmatprep.subr.mxu0 0.0
        %489 = vmatpush1.msra.mxu0 0.0
        %490 = vmatprep.subr.mxu0 0.0
        %491 = vmatpush1.msra.mxu0 0.0
        %492 = vmatprep.subr.mxu0 0.0
        %493 = vmatpush1.msra.mxu0 0.0
        %494 = vmatprep.subr.mxu0 0.0
        %495 = vmatpush1.msra.mxu0 0.0
        %496 = vmatprep.subr.mxu0 0.0
        %497 = vmatpush1.msra.mxu0 0.0
        %498 = vmatprep.subr.mxu0 0.0
        %499 = vmatpush1.msra.mxu0 0.0
        %500 = vmatprep.subr.mxu0 0.0
        %501 = vmatpush1.msra.mxu0 0.0
        %502 = vmatprep.subr.mxu0 0.0
        %503 = vmatpush1.msra.mxu0 0.0
        %504 = vmatprep.subr.mxu0 0.0
        %505 = vmatpush1.msra.mxu0 0.0
        %506 = vmatprep.subr.mxu0 0.0
        %507 = vmatpush1.msra.mxu0 0.0
        %508 = vmatprep.subr.mxu0 0.0
        %509 = vmatpush1.msra.mxu0 0.0
        %510 = vmatprep.subr.mxu0 0.0
        %511 = vmatpush1.msra.mxu0 0.0
        %512 = vmatprep.subr.mxu0 0.0
        %513 = vmatpush1.msra.mxu0 0.0
        %514 = vmatprep.subr.mxu0 0.0
        %515 = vmatpush1.msra.mxu0 0.0
        %516 = vmatprep.subr.mxu0 0.0
        %517 = vmatpush1.msra.mxu0 0.0
        %518 = vmatprep.subr.mxu0 0.0
        %519 = vmatpush1.msra.mxu0 0.0
        %520 = vmatprep.subr.mxu0 0.0
        %521 = vmatpush1.msra.mxu0 0.0
        %522 = vmatprep.mubr.f32.mxu0 0.0
        %523 = vmatmul.mubr.f32.gmra.mrb[0].mxu0 %v446
        %v524 = vpop.f32.mrb[0].mxu0
        %v525 = vadd.f32 %v437, %v524
        %v526 = vpop.f32.mrb[0].mxu0
        %v527 = vadd.f32 %v437, %v526
        %528 = vmatprep.mubr.f32.mxu0 0.0
        %529 = vmatmul.mubr.f32.gmra.mrb[0].mxu0 %v449
        %v530 = vpop.f32.mrb[0].mxu0
        %v531 = vadd.f32 %v442, %v530
        %v532 = vpop.f32.mrb[0].mxu0
        %v533 = vadd.f32 %v442, %v532
        %534 = vdwg.mxu0
        %v535 = vmax.f32 %v525, 0.0
        %v536 = vmax.f32 %v527, 0.0
        %v537 = vmax.f32 %v531, 0.0
        %v538 = vmax.f32 %v533, 0.0
        %v539 = vld [vmem:[%s3] sm:$0x3]
        %v540 = vld [vmem:[%s4 + $0x10] sm:$0x3]
        %542 = vset.pattern.permute.xlu0 0
        %543 = vperm.xlu0 %542, %v540
        %v544 = vpop.permute.xlu0 %543
        %vm546 = vcmask 130048
        %v548 = vsel %vm546, %v539, 0
        %550 = vmatprep.subr.mxu0 %v536
        %551 = vmatpush1.msra.mxu0 %v535
        %552 = vmatprep.subr.mxu0 %v538
        %553 = vmatpush1.msra.mxu0 %v537
        %554 = vmatprep.subr.mxu0 0.0
        %555 = vmatpush1.msra.mxu0 0.0
        %556 = vmatprep.subr.mxu0 0.0
        %557 = vmatpush1.msra.mxu0 0.0
        %558 = vmatprep.subr.mxu0 0.0
        %559 = vmatpush1.msra.mxu0 0.0
        %560 = vmatprep.subr.mxu0 0.0
        %561 = vmatpush1.msra.mxu0 0.0
        %562 = vmatprep.subr.mxu0 0.0
        %563 = vmatpush1.msra.mxu0 0.0
        %564 = vmatprep.subr.mxu0 0.0
        %565 = vmatpush1.msra.mxu0 0.0
        %566 = vmatprep.subr.mxu0 0.0
        %567 = vmatpush1.msra.mxu0 0.0
        %568 = vmatprep.subr.mxu0 0.0
        %569 = vmatpush1.msra.mxu0 0.0
        %570 = vmatprep.subr.mxu0 0.0
        %571 = vmatpush1.msra.mxu0 0.0
        %572 = vmatprep.subr.mxu0 0.0
        %573 = vmatpush1.msra.mxu0 0.0
        %574 = vmatprep.subr.mxu0 0.0
        %575 = vmatpush1.msra.mxu0 0.0
        %576 = vmatprep.subr.mxu0 0.0
        %577 = vmatpush1.msra.mxu0 0.0
        %578 = vmatprep.subr.mxu0 0.0
        %579 = vmatpush1.msra.mxu0 0.0
        %580 = vmatprep.subr.mxu0 0.0
        %581 = vmatpush1.msra.mxu0 0.0
        %582 = vmatprep.subr.mxu0 0.0
        %583 = vmatpush1.msra.mxu0 0.0
        %584 = vmatprep.subr.mxu0 0.0
        %585 = vmatpush1.msra.mxu0 0.0
        %586 = vmatprep.subr.mxu0 0.0
        %587 = vmatpush1.msra.mxu0 0.0
        %588 = vmatprep.subr.mxu0 0.0
        %589 = vmatpush1.msra.mxu0 0.0
        %590 = vmatprep.subr.mxu0 0.0
        %591 = vmatpush1.msra.mxu0 0.0
        %592 = vmatprep.subr.mxu0 0.0
        %593 = vmatpush1.msra.mxu0 0.0
        %594 = vmatprep.subr.mxu0 0.0
        %595 = vmatpush1.msra.mxu0 0.0
        %596 = vmatprep.subr.mxu0 0.0
        %597 = vmatpush1.msra.mxu0 0.0
        %598 = vmatprep.subr.mxu0 0.0
        %599 = vmatpush1.msra.mxu0 0.0
        %600 = vmatprep.subr.mxu0 0.0
        %601 = vmatpush1.msra.mxu0 0.0
        %602 = vmatprep.subr.mxu0 0.0
        %603 = vmatpush1.msra.mxu0 0.0
        %604 = vmatprep.subr.mxu0 0.0
        %605 = vmatpush1.msra.mxu0 0.0
        %606 = vmatprep.subr.mxu0 0.0
        %607 = vmatpush1.msra.mxu0 0.0
        %608 = vmatprep.subr.mxu0 0.0
        %609 = vmatpush1.msra.mxu0 0.0
        %610 = vmatprep.subr.mxu0 0.0
        %611 = vmatpush1.msra.mxu0 0.0
        %612 = vmatprep.subr.mxu0 0.0
        %613 = vmatpush1.msra.mxu0 0.0
        %614 = vmatprep.mubr.f32.mxu0 0.0
        %615 = vmatmul.mubr.f32.gmra.mrb[0].mxu0 %v548
        %v616 = vpop.f32.mrb[0].mxu0
        %v617 = vadd.f32 %v544, %v616
        %v618 = vpop.f32.mrb[0].mxu0
        %v619 = vadd.f32 %v544, %v618
        %620 = vdwg.mxu0
        %v623 = vcombine.low %v617, %v619
        %v625 = vunpack.c.l.s4 1983009808
        %v626 = vunpack.c.0.s8 %v625
        %v627 = vlaneseq
        %v628 = vshrl.u32 %v627, 7
        %v629 = vsub.s32 %v626, %v628
        %v630 = vrot.slane %v623, %v629
        %632 = vst [vmem:[%s252] sm:$0xf] %v630
        %s633 = sand.u32 %s137, 1
        %s634 = scalar_lea.sflag [#allocation4], %s633
        %s635 = sand.u32 %s137, 1
        %s636 = smul.addr %s635, 4
        %s637 = scalar_lea.vmem [#allocation3], %s636
        // Predicated region
        $region64: #{tpu_custom_call.1} parent=58 // pred_check
          %p638 = pneg %p147
        $region65: #{tpu_custom_call.1} parent=58 // pred_check_branch
          %640 = sbr.rel (%p638) target = $region67
        $region66: #{tpu_custom_call.1} parent=58 // pred_region
          %s641 = smul.u32 2, %s19
          %s643 = ssub.s32 64, 64
          %644 = vsyncadd %s634, %s643
          %s645 = smul.addr %s641, 32
          %s646 = scalar_lea.hbm %s5, %s645
          %s648 = sshll.u32 %s637, 4
          %s649 = int_to_ptr.vmem [resolvable:$true] %s648
          %651 = dma.vmem_to_hbm [thread:$0]  %s649, 64, %s646, %s634
        $region67: #{tpu_custom_call.1} parent=58 // pred_fallthru
          _
      $region59: #{tpu_custom_call.1} parent=5 // pred_fallthru
        _
      %p652 = scmp.le.s32.totalorder 2, %s14
      // Predicated region
      $region68: #{tpu_custom_call.1} parent=5 // pred_check
        %p653 = pneg %p652
      $region69: #{tpu_custom_call.1} parent=5 // pred_check_branch
        %655 = sbr.rel (%p653) target = $region71
      $region70: #{tpu_custom_call.1} parent=5 // pred_region
        %s656 = ssub.s32 %s14, 2
        // Predicated region
        $region72: #{tpu_custom_call.1} parent=70 // pred_check
          %p657 = pneg %p153
        $region73: #{tpu_custom_call.1} parent=70 // pred_check_branch
          %659 = sbr.rel (%p657) target = $region75
        $region74: #{tpu_custom_call.1} parent=70 // pred_region
          %s660 = sand.u32 %s138, 1
          %s661 = scalar_lea.sflag [#allocation4], %s660
          %s662 = sand.u32 %s138, 1
          %s663 = smul.addr %s662, 4
          %s664 = scalar_lea.vmem [#allocation3], %s663
          %665 = dma.done %s661, 64
        $region75: #{tpu_custom_call.1} parent=70 // pred_fallthru
          _
      $region71: #{tpu_custom_call.1} parent=5 // pred_fallthru
        _
    $region6: #{tpu_custom_call.1} parent=1 // loop_footer
      %s18 = sadd.s32 1, %s14
    $region7: #{tpu_custom_call.1} parent=1 // loop_footer_branch
      %13 = sbr.rel target = $region3
    $region8: #{tpu_custom_call.1} parent=1 // loop_exit
      _
    %666 = vsyncpa [#allocation4], 1
    %s667 = scalar_lea.sflag [#allocation4], 1
    %668 = vsyncpa %s667, 1

</llo_original>
